<compile_context>
chip_gen: v6e
topology: v6e:2x2x1
jax: 0.10.0
libtpu: 0.0.40
codegen_flags: <defaults>
</compile_context>

<pallas_src>
import functools

import jax
import jax.numpy as jnp
from jax.experimental import pallas as pl
from jax.experimental.pallas import tpu as pltpu


def _round_up(x: int, m: int) -> int:
    return ((x + m - 1) // m) * m


def _gelu(x):
    # tanh-approximation GELU: 0.5*x*(1 + tanh(sqrt(2/pi)*(x + 0.044715*x^3))).
    # Matches the hand-rolled GELU module used alongside this FFN; tanh lands on the EUP.
    c = jnp.sqrt(2.0 / jnp.pi).astype(x.dtype)
    return 0.5 * x * (1.0 + jnp.tanh(c * (x + 0.044715 * (x * x * x))))


def ffn_kernel(x_ref, w1_ref, b1_ref, w2_ref, b2_ref, o_ref, acc_ref):
    # grid = (M tiles, hidden tiles); hidden is the reduction axis ("arbitrary").
    # x_ref:  (TM, dim_p)        w1_ref: (dim_p, TH)   b1_ref: (1, TH)
    # w2_ref: (TH, dim_p)        b2_ref: (1, dim_p)    o_ref/acc_ref: (TM, dim_p)
    k = pl.program_id(1)

    @pl.when(k == 0)
    def _():
        acc_ref[...] = jnp.zeros_like(acc_ref)

    # Native-dtype operands straight to the MXU; accumulate in f32.
    h = jnp.dot(x_ref[...], w1_ref[...], preferred_element_type=jnp.float32)
    h = _gelu(h + b1_ref[...].astype(jnp.float32))
    acc_ref[...] += jnp.dot(h.astype(w2_ref.dtype), w2_ref[...],
                            preferred_element_type=jnp.float32)

    # Dropout(p=0.0) is the identity -> nothing to do.
    @pl.when(k == pl.num_programs(1) - 1)
    def _():
        o_ref[...] = (acc_ref[...]
                      + b2_ref[...].astype(jnp.float32)).astype(o_ref.dtype)


@functools.partial(jax.jit, static_argnames=("tile_m", "tile_h"))
def ffn_forward(x, w1, b1, w2, b2, *, tile_m=256, tile_h=512):
    """x: (batch, seq, dim) -> (batch, seq, dim)."""
    batch, seq, dim = x.shape
    hidden = w1.shape[1]
    n = batch * seq
    dt = x.dtype
    itemsize = jnp.dtype(dt).itemsize

    # ---- Pad to lane-/MXU-friendly shapes (feature dims -> multiples of 128). ----
    dim_p = _round_up(dim, 128)
    hid_p = _round_up(hidden, 128)
    tile_h = min(tile_h, hid_p)
    hid_p = _round_up(hid_p, tile_h)            # exact divisibility by the hidden tile
    tile_m = min(tile_m, _round_up(n, 8))       # don't over-tile tiny inputs
    n_p = _round_up(n, tile_m)

    # Zero padding keeps the math exact: padded hidden units see b1=0 -> gelu(0)=0,
    # and padded feature columns of w2/b2 are zero (sliced off at the end anyway).
    x2d = jnp.pad(x.reshape(n, dim), ((0, n_p - n), (0, dim_p - dim)))
    w1p = jnp.pad(w1, ((0, dim_p - dim), (0, hid_p - hidden)))
    b1p = jnp.pad(b1.reshape(1, hidden), ((0, 0), (0, hid_p - hidden)))
    w2p = jnp.pad(w2, ((0, hid_p - hidden), (0, dim_p - dim)))
    b2p = jnp.pad(b2.reshape(1, dim), ((0, 0), (0, dim_p - dim)))

    grid = (n_p // tile_m, hid_p // tile_h)

    # VMEM budget: double-buffered tiles + f32 accumulator + intermediate, with headroom.
    vmem_est = (2 * tile_m * dim_p * itemsize          # x tile
                + 2 * dim_p * tile_h * itemsize        # w1 chunk
                + 2 * 8 * tile_h * itemsize            # b1 chunk (sublane-padded)
                + 2 * tile_h * dim_p * itemsize        # w2 chunk
                + 2 * 8 * dim_p * itemsize             # b2
                + 2 * tile_m * dim_p * itemsize        # out tile
                + tile_m * dim_p * 4                   # f32 accumulator scratch
                + 2 * tile_m * tile_h * 4)             # (TM, TH) intermediate
    vmem_limit = int(min(max(2 * vmem_est, 16 << 20), 96 << 20))

    cost = pl.CostEstimate(
        flops=4 * n_p * dim_p * hid_p,                 # two matmuls
        transcendentals=n_p * hid_p,                   # tanh in GELU
        bytes_accessed=(x2d.size + w1p.size + b1p.size + w2p.size + b2p.size
                        + n_p * dim_p) * itemsize,
    )

    out = pl.pallas_call(
        ffn_kernel,
        out_shape=jax.ShapeDtypeStruct((n_p, dim_p), dt),
        grid_spec=pltpu.PrefetchScalarGridSpec(
            num_scalar_prefetch=0,
            grid=grid,
            in_specs=[
                pl.BlockSpec((tile_m, dim_p), lambda i, k: (i, 0)),   # x tile (const over k)
                pl.BlockSpec((dim_p, tile_h), lambda i, k: (0, k)),   # w1 hidden-chunk
                pl.BlockSpec((1, tile_h), lambda i, k: (0, k)),       # b1 hidden-chunk
                pl.BlockSpec((tile_h, dim_p), lambda i, k: (k, 0)),   # w2 hidden-chunk
                pl.BlockSpec((1, dim_p), lambda i, k: (0, 0)),        # b2 (const)
            ],
            out_specs=pl.BlockSpec((tile_m, dim_p), lambda i, k: (i, 0)),
            scratch_shapes=[pltpu.VMEM((tile_m, dim_p), jnp.float32)],
        ),
        compiler_params=pltpu.CompilerParams(
            dimension_semantics=("parallel", "arbitrary"),
            vmem_limit_bytes=vmem_limit,
        ),
        cost_estimate=cost,
    )(x2d, w1p, b1p, w2p, b2p)

    return out[:n, :dim].reshape(batch, seq, dim)


def ffn_reference(x, w1, b1, w2, b2):
    h = _gelu(jnp.einsum("bsd,dh->bsh", x, w1) + b1)
    return jnp.einsum("bsh,hd->bsd", h, w2) + b2


if __name__ == "__main__":
    batch, seq, dim, hidden = 2, 8, 32, 64  # n = 16 tokens (small smoke-test shapes)
    key = jax.random.PRNGKey(0)
    kx, kw1, kb1, kw2, kb2 = jax.random.split(key, 5)

    x = jax.random.normal(kx, (batch, seq, dim), dtype=jnp.float32)
    # Deterministic synthetic parameters (shapes from nn.Linear(dim,hidden)/(hidden,dim),
    # stored transposed for the kernel).
    w1 = jax.random.normal(kw1, (dim, hidden), dtype=jnp.float32) * 0.05
    b1 = jax.random.normal(kb1, (hidden,), dtype=jnp.float32) * 0.01
    w2 = jax.random.normal(kw2, (hidden, dim), dtype=jnp.float32) * 0.05
    b2 = jax.random.normal(kb2, (dim,), dtype=jnp.float32) * 0.01

    out = ffn_forward(x, w1, b1, w2, b2)
    out = jax.block_until_ready(out)

    ref = ffn_reference(x, w1, b1, w2, b2)
    assert out.shape == (batch, seq, dim)
    assert jnp.allclose(out, ref, atol=1e-5, rtol=1e-5), "mismatch vs reference"

    print("KERNEL_OK")
</pallas_src>

<mosaic_0001>
module attributes {stable_mosaic.version = 11 : i64} {
  func.func @ffn_kernel(%arg0: i32, %arg1: i32, %arg2: memref<16x128xf32, #tpu.memory_space<vmem>>, %arg3: memref<128x128xf32, #tpu.memory_space<vmem>>, %arg4: memref<1x128xf32, #tpu.memory_space<vmem>>, %arg5: memref<128x128xf32, #tpu.memory_space<vmem>>, %arg6: memref<1x128xf32, #tpu.memory_space<vmem>>, %arg7: memref<16x128xf32, #tpu.memory_space<vmem>>, %arg8: memref<16x128xf32, #tpu.memory_space<vmem>>) attributes {dimension_semantics = [#tpu.dimension_semantics<parallel>, #tpu.dimension_semantics<arbitrary>], iteration_bounds = array<i64: 1, 1>, scalar_prefetch = 0 : i64, scratch_operands = 1 : i64, tpu.core_type = #tpu.core_type<tc>, window_params = [{transform_indices = @transform_0, window_bounds = array<i64: 16, 128>}, {transform_indices = @transform_1, window_bounds = array<i64: 128, 128>}, {transform_indices = @transform_2, window_bounds = array<i64: 1, 128>}, {transform_indices = @transform_3, window_bounds = array<i64: 128, 128>}, {pipeline_mode = #tpu.pipeline_mode<synchronous>, transform_indices = @transform_4, window_bounds = array<i64: 1, 128>}, {transform_indices = @transform_5, window_bounds = array<i64: 16, 128>}]} {
    %c0_i32 = arith.constant 0 : i32
    %0 = arith.cmpi eq, %arg1, %c0_i32 : i32
    %1 = arith.extui %0 : i1 to i32
    %c0_i32_0 = arith.constant 0 : i32
    %2 = arith.cmpi ne, %1, %c0_i32_0 : i32
    scf.if %2 {
      %cst_19 = arith.constant 0.000000e+00 : f32
      %31 = vector.broadcast %cst_19 : f32 to vector<16x128xf32>
      %c0_20 = arith.constant 0 : index
      %c0_21 = arith.constant 0 : index
      %32 = vector.load %arg8[%c0_20, %c0_21] : memref<16x128xf32, #tpu.memory_space<vmem>>, vector<16x128xf32>
      tpu.vector_store %arg8[%c0_20, %c0_21], %31 {strides = array<i32>} : memref<16x128xf32, #tpu.memory_space<vmem>>, vector<16x128xf32>,
    } else {
    }
    %c0 = arith.constant 0 : index
    %c0_1 = arith.constant 0 : index
    %3 = vector.load %arg2[%c0, %c0_1] : memref<16x128xf32, #tpu.memory_space<vmem>>, vector<16x128xf32>
    %c0_2 = arith.constant 0 : index
    %c0_3 = arith.constant 0 : index
    %4 = vector.load %arg3[%c0_2, %c0_3] : memref<128x128xf32, #tpu.memory_space<vmem>>, vector<128x128xf32>
    %cst = arith.constant dense<0.000000e+00> : vector<16x128xf32>
    %5 = tpu.matmul %3, %4, %cst {dimension_numbers = #tpu.dot_dimension_numbers<[1], [0], [0], [1], [0, 0, 1, 1], [], []>} : vector<16x128xf32>, vector<128x128xf32>, vector<16x128xf32> -> vector<16x128xf32>
    %c0_4 = arith.constant 0 : index
    %c0_5 = arith.constant 0 : index
    %6 = vector.load %arg4[%c0_4, %c0_5] : memref<1x128xf32, #tpu.memory_space<vmem>>, vector<1x128xf32>
    %7 = vector.broadcast %6 : vector<1x128xf32> to vector<16x128xf32>
    %8 = arith.addf %5, %7 : vector<16x128xf32>
    %cst_6 = arith.constant 0.636619746 : f32
    %9 = math.sqrt %cst_6 : f32
    %cst_7 = arith.constant 5.000000e-01 : f32
    %10 = vector.broadcast %cst_7 : f32 to vector<16x128xf32>
    %11 = arith.mulf %10, %8 : vector<16x128xf32>
    %12 = arith.mulf %8, %8 : vector<16x128xf32>
    %13 = arith.mulf %12, %8 : vector<16x128xf32>
    %cst_8 = arith.constant 4.471500e-02 : f32
    %14 = vector.broadcast %cst_8 : f32 to vector<16x128xf32>
    %15 = arith.mulf %14, %13 : vector<16x128xf32>
    %16 = arith.addf %8, %15 : vector<16x128xf32>
    %17 = vector.broadcast %9 : f32 to vector<16x128xf32>
    %18 = arith.mulf %17, %16 : vector<16x128xf32>
    %19 = math.tanh %18 : vector<16x128xf32>
    %cst_9 = arith.constant 1.000000e+00 : f32
    %20 = vector.broadcast %cst_9 : f32 to vector<16x128xf32>
    %21 = arith.addf %20, %19 : vector<16x128xf32>
    %22 = arith.mulf %11, %21 : vector<16x128xf32>
    %c0_10 = arith.constant 0 : index
    %c0_11 = arith.constant 0 : index
    %23 = vector.load %arg8[%c0_10, %c0_11] : memref<16x128xf32, #tpu.memory_space<vmem>>, vector<16x128xf32>
    %c0_12 = arith.constant 0 : index
    %c0_13 = arith.constant 0 : index
    %24 = vector.load %arg5[%c0_12, %c0_13] : memref<128x128xf32, #tpu.memory_space<vmem>>, vector<128x128xf32>
    %cst_14 = arith.constant dense<0.000000e+00> : vector<16x128xf32>
    %25 = tpu.matmul %22, %24, %cst_14 {dimension_numbers = #tpu.dot_dimension_numbers<[1], [0], [0], [1], [0, 0, 1, 1], [], []>} : vector<16x128xf32>, vector<128x128xf32>, vector<16x128xf32> -> vector<16x128xf32>
    %26 = arith.addf %23, %25 : vector<16x128xf32>
    %c0_15 = arith.constant 0 : index
    %c0_16 = arith.constant 0 : index
    %27 = vector.load %arg8[%c0_15, %c0_16] : memref<16x128xf32, #tpu.memory_space<vmem>>, vector<16x128xf32>
    tpu.vector_store %arg8[%c0_15, %c0_16], %26 {strides = array<i32>} : memref<16x128xf32, #tpu.memory_space<vmem>>, vector<16x128xf32>,
    %c0_i32_17 = arith.constant 0 : i32
    %28 = arith.cmpi eq, %arg1, %c0_i32_17 : i32
    %29 = arith.extui %28 : i1 to i32
    %c0_i32_18 = arith.constant 0 : i32
    %30 = arith.cmpi ne, %29, %c0_i32_18 : i32
    scf.if %30 {
      %c0_19 = arith.constant 0 : index
      %c0_20 = arith.constant 0 : index
      %31 = vector.load %arg8[%c0_19, %c0_20] : memref<16x128xf32, #tpu.memory_space<vmem>>, vector<16x128xf32>
      %c0_21 = arith.constant 0 : index
      %c0_22 = arith.constant 0 : index
      %32 = vector.load %arg6[%c0_21, %c0_22] : memref<1x128xf32, #tpu.memory_space<vmem>>, vector<1x128xf32>
      %33 = vector.broadcast %32 : vector<1x128xf32> to vector<16x128xf32>
      %34 = arith.addf %31, %33 : vector<16x128xf32>
      %c0_23 = arith.constant 0 : index
      %c0_24 = arith.constant 0 : index
      %35 = vector.load %arg7[%c0_23, %c0_24] : memref<16x128xf32, #tpu.memory_space<vmem>>, vector<16x128xf32>
      tpu.vector_store %arg7[%c0_23, %c0_24], %34 {strides = array<i32>} : memref<16x128xf32, #tpu.memory_space<vmem>>, vector<16x128xf32>,
    } else {
    }
    return
  }
  func.func @transform_0(%arg0: i32, %arg1: i32) -> (i32, i32) {
    %c0_i32 = arith.constant 0 : i32
    %c0_i32_0 = arith.constant 0 : i32
    return %arg0, %c0_i32 : i32, i32
  }
  func.func @transform_1(%arg0: i32, %arg1: i32) -> (i32, i32) {
    %c0_i32 = arith.constant 0 : i32
    %c0_i32_0 = arith.constant 0 : i32
    return %c0_i32, %arg1 : i32, i32
  }
  func.func @transform_2(%arg0: i32, %arg1: i32) -> (i32, i32) {
    %c0_i32 = arith.constant 0 : i32
    %c0_i32_0 = arith.constant 0 : i32
    return %c0_i32, %arg1 : i32, i32
  }
  func.func @transform_3(%arg0: i32, %arg1: i32) -> (i32, i32) {
    %c0_i32 = arith.constant 0 : i32
    %c0_i32_0 = arith.constant 0 : i32
    return %arg1, %c0_i32 : i32, i32
  }
  func.func @transform_4(%arg0: i32, %arg1: i32) -> (i32, i32) {
    %c0_i32 = arith.constant 0 : i32
    %c0_i32_0 = arith.constant 0 : i32
    %c0_i32_1 = arith.constant 0 : i32
    return %c0_i32, %c0_i32_0 : i32, i32
  }
  func.func @transform_5(%arg0: i32, %arg1: i32) -> (i32, i32) {
    %c0_i32 = arith.constant 0 : i32
    %c0_i32_0 = arith.constant 0 : i32
    return %arg0, %c0_i32 : i32, i32
  }
}

</mosaic_0001>

<llo_original>
// kernel: ffn_forward.1
$region0: #{ffn_forward.1}
  #allocation0 [shape = 'u32[]', space=smem, size = 0x4, offset = 0x4, fixed_abs, tag = 'smem constant byte address 0x4 - core index']
  #allocation1 [shape = 'u32[144,128]{1,0:T(1,128)}', space=vmem, size = 0x12000, scoped, tag = 'internal scratch']
  #allocation2 [shape = 'f32[16,128]{1,0:T(8,128)}', space=vmem, size = 0x2000, scoped, tag = 'scratch operand']
  %s0 = inlined_call_operand.vmem [shape: f32[16,128], index: 0, kind: input, shape index: {}]
  %s1 = inlined_call_operand.vmem [shape: f32[128,128], index: 1, kind: input, shape index: {}]
  %s2 = inlined_call_operand.vmem [shape: f32[1,128], index: 2, kind: input, shape index: {}]
  %s3 = inlined_call_operand.vmem [shape: f32[128,128], index: 3, kind: input, shape index: {}]
  %s4 = inlined_call_operand.vmem [shape: f32[1,128], index: 4, kind: input, shape index: {}]
  %s5 = inlined_call_operand.vmem [shape: f32[16,128], index: 5, kind: output, shape index: {}]
  %s6 = sld [smem:[#allocation0]]
  $region38: #{ffn_forward.1} parent=0
    _
  %s8 = ssub.s32 1, %s6
  %s9 = scalar_select 0, %s8, %s6
  // Predicated region
  $region2: #{ffn_forward.1} parent=0 // pred_check
    _
  $region3: #{ffn_forward.1} parent=0 // pred_check_branch
    %11 = sbr.rel (0) target = $region5
  $region4: #{ffn_forward.1} parent=0 // pred_region
    _
  $region5: #{ffn_forward.1} parent=0 // pred_fallthru
    _
  // Predicated region
  $region6: #{ffn_forward.1} parent=0 // pred_check
    _
  $region7: #{ffn_forward.1} parent=0 // pred_check_branch
    %13 = sbr.rel (0) target = $region9
  $region8: #{ffn_forward.1} parent=0 // pred_region
    _
  $region9: #{ffn_forward.1} parent=0 // pred_fallthru
    _
  // Predicated region
  $region10: #{ffn_forward.1} parent=0 // pred_check
    _
  $region11: #{ffn_forward.1} parent=0 // pred_check_branch
    %15 = sbr.rel (0) target = $region13
  $region12: #{ffn_forward.1} parent=0 // pred_region
    _
  $region13: #{ffn_forward.1} parent=0 // pred_fallthru
    _
  // Predicated region
  $region14: #{ffn_forward.1} parent=0 // pred_check
    _
  $region15: #{ffn_forward.1} parent=0 // pred_check_branch
    %17 = sbr.rel (0) target = $region17
  $region16: #{ffn_forward.1} parent=0 // pred_region
    _
  $region17: #{ffn_forward.1} parent=0 // pred_fallthru
    _
  // Predicated region
  $region18: #{ffn_forward.1} parent=0 // pred_check
    _
  $region19: #{ffn_forward.1} parent=0 // pred_check_branch
    %19 = sbr.rel (0) target = $region21
  $region20: #{ffn_forward.1} parent=0 // pred_region
    _
  $region21: #{ffn_forward.1} parent=0 // pred_fallthru
    _
  %p20 = scmp.eq.s32.totalorder 0, 0
  // Predicated region
  $region22: #{ffn_forward.1} parent=0 // pred_check
    %p21 = pneg %p20
  $region23: #{ffn_forward.1} parent=0 // pred_check_branch
    %23 = sbr.rel (%p21) target = $region25
  $region24: #{ffn_forward.1} parent=0 // pred_region
    %24 = vst [vmem:[#allocation2] sm:$0xff] 0.0
    %25 = vst [vmem:[#allocation2 + $0x8] sm:$0xff] 0.0
  $region25: #{ffn_forward.1} parent=0 // pred_fallthru
    _
  %v26 = vld [vmem:[%s0] sm:$0xff]
  %v27 = vld [vmem:[%s0 + $0x8] sm:$0xff]
  %v28 = vld [vmem:[%s1] sm:$0xff]
  %v29 = vld [vmem:[%s1 + $0x8] sm:$0xff]
  %v30 = vld [vmem:[%s1 + $0x10] sm:$0xff]
  %v31 = vld [vmem:[%s1 + $0x18] sm:$0xff]
  %v32 = vld [vmem:[%s1 + $0x20] sm:$0xff]
  %v33 = vld [vmem:[%s1 + $0x28] sm:$0xff]
  %v34 = vld [vmem:[%s1 + $0x30] sm:$0xff]
  %v35 = vld [vmem:[%s1 + $0x38] sm:$0xff]
  %v36 = vld [vmem:[%s1 + $0x40] sm:$0xff]
  %v37 = vld [vmem:[%s1 + $0x48] sm:$0xff]
  %v38 = vld [vmem:[%s1 + $0x50] sm:$0xff]
  %v39 = vld [vmem:[%s1 + $0x58] sm:$0xff]
  %v40 = vld [vmem:[%s1 + $0x60] sm:$0xff]
  %v41 = vld [vmem:[%s1 + $0x68] sm:$0xff]
  %v42 = vld [vmem:[%s1 + $0x70] sm:$0xff]
  %v43 = vld [vmem:[%s1 + $0x78] sm:$0xff]
  %v44 = vld [vmem:[%s2] sm:$0x1]
  %v46 = vlaneseq
  %v47 = vshrl.u32 %v46, 7
  %v48 = vsub.s32 0, %v47
  %v49 = vrot.slane %v44, %v48
  %51 = vmatprep.subr.mxu0 0.0
  %52 = vmatpush1.msra.mxu0 %v43
  %53 = vmatprep.subr.mxu0 0.0
  %54 = vmatpush1.msra.mxu0 %v42
  %55 = vmatprep.subr.mxu0 0.0
  %56 = vmatpush1.msra.mxu0 %v41
  %57 = vmatprep.subr.mxu0 0.0
  %58 = vmatpush1.msra.mxu0 %v40
  %59 = vmatprep.subr.mxu0 0.0
  %60 = vmatpush1.msra.mxu0 %v39
  %61 = vmatprep.subr.mxu0 0.0
  %62 = vmatpush1.msra.mxu0 %v38
  %63 = vmatprep.subr.mxu0 0.0
  %64 = vmatpush1.msra.mxu0 %v37
  %65 = vmatprep.subr.mxu0 0.0
  %66 = vmatpush1.msra.mxu0 %v36
  %67 = vmatprep.subr.mxu0 0.0
  %68 = vmatpush1.msra.mxu0 %v35
  %69 = vmatprep.subr.mxu0 0.0
  %70 = vmatpush1.msra.mxu0 %v34
  %71 = vmatprep.subr.mxu0 0.0
  %72 = vmatpush1.msra.mxu0 %v33
  %73 = vmatprep.subr.mxu0 0.0
  %74 = vmatpush1.msra.mxu0 %v32
  %75 = vmatprep.subr.mxu0 0.0
  %76 = vmatpush1.msra.mxu0 %v31
  %77 = vmatprep.subr.mxu0 0.0
  %78 = vmatpush1.msra.mxu0 %v30
  %79 = vmatprep.subr.mxu0 0.0
  %80 = vmatpush1.msra.mxu0 %v29
  %81 = vmatprep.subr.mxu0 0.0
  %82 = vmatpush1.msra.mxu0 %v28
  %83 = vmatprep.subr.mxu0 0.0
  %84 = vmatpush2.msra.mxu0 0.0
  %85 = vmatprep.subr.mxu0 0.0
  %86 = vmatpush2.msra.mxu0 0.0
  %87 = vmatprep.subr.mxu0 0.0
  %88 = vmatpush2.msra.mxu0 0.0
  %89 = vmatprep.subr.mxu0 0.0
  %90 = vmatpush2.msra.mxu0 0.0
  %91 = vmatprep.subr.mxu0 0.0
  %92 = vmatpush2.msra.mxu0 0.0
  %93 = vmatprep.subr.mxu0 0.0
  %94 = vmatpush2.msra.mxu0 0.0
  %95 = vmatprep.subr.mxu0 0.0
  %96 = vmatpush2.msra.mxu0 0.0
  %97 = vmatprep.subr.mxu0 0.0
  %98 = vmatpush2.msra.mxu0 0.0
  %99 = vmatprep.subr.mxu0 0.0
  %100 = vmatpush2.msra.mxu0 0.0
  %101 = vmatprep.subr.mxu0 0.0
  %102 = vmatpush2.msra.mxu0 0.0
  %103 = vmatprep.subr.mxu0 0.0
  %104 = vmatpush2.msra.mxu0 0.0
  %105 = vmatprep.subr.mxu0 0.0
  %106 = vmatpush2.msra.mxu0 0.0
  %107 = vmatprep.subr.mxu0 0.0
  %108 = vmatpush2.msra.mxu0 0.0
  %109 = vmatprep.subr.mxu0 0.0
  %110 = vmatpush2.msra.mxu0 0.0
  %111 = vmatprep.subr.mxu0 0.0
  %112 = vmatpush2.msra.mxu0 0.0
  %113 = vmatprep.subr.mxu0 0.0
  %114 = vmatpush2.msra.mxu0 0.0
  %115 = vmatprep.mubr.f32.mxu0 0.0
  %116 = vmatmul.mubr.f32.gmra.mxu0 %v26
  %v117 = vpop.f32.mrf.mxu0
  %v118 = vadd.f32 %v49, %v117
  %v119 = vpop.f32.mrf.mxu0
  %120 = vmatprep.mubr.f32.mxu0 0.0
  %121 = vmatmul.mubr.f32.gmra.mxu0 %v27
  %v122 = vpop.f32.mrf.mxu0
  %v123 = vadd.f32 %v49, %v122
  %v124 = vpop.f32.mrf.mxu0
  %125 = vdwg.mxu0
  %v126 = vmul.f32 %v118, 0.5
  %v127 = vmul.f32 %v123, 0.5
  %v128 = vmul.f32 %v118, %v118
  %v129 = vmul.f32 %v123, %v123
  %v130 = vmul.f32 %v128, %v118
  %v131 = vmul.f32 %v129, %v123
  %v132 = vmul.f32 %v130, 0.044715
  %v133 = vmul.f32 %v131, 0.044715
  %v134 = vadd.f32 %v118, %v132
  %v135 = vadd.f32 %v123, %v133
  %v136 = vmul.f32 %v134, 0.7978845
  %v137 = vmul.f32 %v135, 0.7978845
  %v138 = vtanh.pop %v136
  %v139 = vtanh.pop %v137
  %v140 = vadd.f32 %v138, 1.0
  %v141 = vadd.f32 %v139, 1.0
  %v142 = vmul.f32 %v126, %v140
  %v143 = vmul.f32 %v127, %v141
  %v144 = vld [vmem:[#allocation2] sm:$0xff]
  %v145 = vld [vmem:[#allocation2 + $0x8] sm:$0xff]
  %v146 = vld [vmem:[%s3] sm:$0xff]
  %v147 = vld [vmem:[%s3 + $0x8] sm:$0xff]
  %v148 = vld [vmem:[%s3 + $0x10] sm:$0xff]
  %v149 = vld [vmem:[%s3 + $0x18] sm:$0xff]
  %v150 = vld [vmem:[%s3 + $0x20] sm:$0xff]
  %v151 = vld [vmem:[%s3 + $0x28] sm:$0xff]
  %v152 = vld [vmem:[%s3 + $0x30] sm:$0xff]
  %v153 = vld [vmem:[%s3 + $0x38] sm:$0xff]
  %v154 = vld [vmem:[%s3 + $0x40] sm:$0xff]
  %v155 = vld [vmem:[%s3 + $0x48] sm:$0xff]
  %v156 = vld [vmem:[%s3 + $0x50] sm:$0xff]
  %v157 = vld [vmem:[%s3 + $0x58] sm:$0xff]
  %v158 = vld [vmem:[%s3 + $0x60] sm:$0xff]
  %v159 = vld [vmem:[%s3 + $0x68] sm:$0xff]
  %v160 = vld [vmem:[%s3 + $0x70] sm:$0xff]
  %v161 = vld [vmem:[%s3 + $0x78] sm:$0xff]
  %162 = vmatprep.subr.mxu0 0.0
  %163 = vmatpush1.msra.mxu0 %v161
  %164 = vmatprep.subr.mxu0 0.0
  %165 = vmatpush1.msra.mxu0 %v160
  %166 = vmatprep.subr.mxu0 0.0
  %167 = vmatpush1.msra.mxu0 %v159
  %168 = vmatprep.subr.mxu0 0.0
  %169 = vmatpush1.msra.mxu0 %v158
  %170 = vmatprep.subr.mxu0 0.0
  %171 = vmatpush1.msra.mxu0 %v157
  %172 = vmatprep.subr.mxu0 0.0
  %173 = vmatpush1.msra.mxu0 %v156
  %174 = vmatprep.subr.mxu0 0.0
  %175 = vmatpush1.msra.mxu0 %v155
  %176 = vmatprep.subr.mxu0 0.0
  %177 = vmatpush1.msra.mxu0 %v154
  %178 = vmatprep.subr.mxu0 0.0
  %179 = vmatpush1.msra.mxu0 %v153
  %180 = vmatprep.subr.mxu0 0.0
  %181 = vmatpush1.msra.mxu0 %v152
  %182 = vmatprep.subr.mxu0 0.0
  %183 = vmatpush1.msra.mxu0 %v151
  %184 = vmatprep.subr.mxu0 0.0
  %185 = vmatpush1.msra.mxu0 %v150
  %186 = vmatprep.subr.mxu0 0.0
  %187 = vmatpush1.msra.mxu0 %v149
  %188 = vmatprep.subr.mxu0 0.0
  %189 = vmatpush1.msra.mxu0 %v148
  %190 = vmatprep.subr.mxu0 0.0
  %191 = vmatpush1.msra.mxu0 %v147
  %192 = vmatprep.subr.mxu0 0.0
  %193 = vmatpush1.msra.mxu0 %v146
  %194 = vmatprep.subr.mxu0 0.0
  %195 = vmatpush2.msra.mxu0 0.0
  %196 = vmatprep.subr.mxu0 0.0
  %197 = vmatpush2.msra.mxu0 0.0
  %198 = vmatprep.subr.mxu0 0.0
  %199 = vmatpush2.msra.mxu0 0.0
  %200 = vmatprep.subr.mxu0 0.0
  %201 = vmatpush2.msra.mxu0 0.0
  %202 = vmatprep.subr.mxu0 0.0
  %203 = vmatpush2.msra.mxu0 0.0
  %204 = vmatprep.subr.mxu0 0.0
  %205 = vmatpush2.msra.mxu0 0.0
  %206 = vmatprep.subr.mxu0 0.0
  %207 = vmatpush2.msra.mxu0 0.0
  %208 = vmatprep.subr.mxu0 0.0
  %209 = vmatpush2.msra.mxu0 0.0
  %210 = vmatprep.subr.mxu0 0.0
  %211 = vmatpush2.msra.mxu0 0.0
  %212 = vmatprep.subr.mxu0 0.0
  %213 = vmatpush2.msra.mxu0 0.0
  %214 = vmatprep.subr.mxu0 0.0
  %215 = vmatpush2.msra.mxu0 0.0
  %216 = vmatprep.subr.mxu0 0.0
  %217 = vmatpush2.msra.mxu0 0.0
  %218 = vmatprep.subr.mxu0 0.0
  %219 = vmatpush2.msra.mxu0 0.0
  %220 = vmatprep.subr.mxu0 0.0
  %221 = vmatpush2.msra.mxu0 0.0
  %222 = vmatprep.subr.mxu0 0.0
  %223 = vmatpush2.msra.mxu0 0.0
  %224 = vmatprep.subr.mxu0 0.0
  %225 = vmatpush2.msra.mxu0 0.0
  %226 = vmatprep.mubr.f32.mxu0 0.0
  %227 = vmatmul.mubr.f32.gmra.mxu0 %v142
  %v228 = vpop.f32.mrf.mxu0
  %v229 = vadd.f32 0.0, %v228
  %v230 = vpop.f32.mrf.mxu0
  %231 = vmatprep.mubr.f32.mxu0 0.0
  %232 = vmatmul.mubr.f32.gmra.mxu0 %v143
  %v233 = vpop.f32.mrf.mxu0
  %v234 = vadd.f32 0.0, %v233
  %v235 = vpop.f32.mrf.mxu0
  %236 = vdwg.mxu0
  %v237 = vadd.f32 %v144, %v229
  %v238 = vadd.f32 %v145, %v234
  %239 = vst [vmem:[#allocation2] sm:$0xff] %v237
  %240 = vst [vmem:[#allocation2 + $0x8] sm:$0xff] %v238
  // Predicated region
  $region26: #{ffn_forward.1} parent=0 // pred_check
    %p241 = pneg %p20
  $region27: #{ffn_forward.1} parent=0 // pred_check_branch
    %243 = sbr.rel (%p241) target = $region29
  $region28: #{ffn_forward.1} parent=0 // pred_region
    %v244 = vld [vmem:[#allocation2] sm:$0xff]
    %v245 = vld [vmem:[#allocation2 + $0x8] sm:$0xff]
    %v246 = vld [vmem:[%s4] sm:$0x1]
    %v248 = vlaneseq
    %v249 = vshrl.u32 %v248, 7
    %v250 = vsub.s32 0, %v249
    %v251 = vrot.slane %v246, %v250
    %v253 = vadd.f32 %v244, %v251
    %v254 = vadd.f32 %v245, %v251
    %255 = vst [vmem:[%s5] sm:$0xff] %v253
    %256 = vst [vmem:[%s5 + $0x8] sm:$0xff] %v254
  $region29: #{ffn_forward.1} parent=0 // pred_fallthru
    _
  // Predicated region
  $region30: #{ffn_forward.1} parent=0 // pred_check
    _
  $region31: #{ffn_forward.1} parent=0 // pred_check_branch
    %258 = sbr.rel (0) target = $region33
  $region32: #{ffn_forward.1} parent=0 // pred_region
    _
  $region33: #{ffn_forward.1} parent=0 // pred_fallthru
    _
  // Predicated region
  $region34: #{ffn_forward.1} parent=0 // pred_check
    _
  $region35: #{ffn_forward.1} parent=0 // pred_check_branch
    %260 = sbr.rel (0) target = $region37
  $region36: #{ffn_forward.1} parent=0 // pred_region
    _
  $region37: #{ffn_forward.1} parent=0 // pred_fallthru
    _

</llo_original>
